<compile_context>
chip_gen: v6e
topology: v6e:2x2x1
jax: 0.10.0
libtpu: 0.0.40
codegen_flags: <defaults>
</compile_context>

<pallas_src>
import functools

import jax
import jax.numpy as jnp
from jax.experimental import pallas as pl
from jax.experimental.pallas import tpu as pltpu


# ---------------------------------------------------------------------------
# Fused kernel: (Conv1d + BN-affine + ReLU) x n_layers -> flatten -> Linear -> L2 norm
# One grid step == one batch element; all intermediates stay in registers/VMEM.
# ---------------------------------------------------------------------------
def _fused_embedding_kernel(*refs, layer_meta, eps, compute_dtype):
    # refs layout: x_ref, (w, scale, shift) per conv layer, w_lin_ref, o_ref
    n_layers = len(layer_meta)
    x_ref = refs[0]
    w_lin_ref = refs[1 + 3 * n_layers]
    o_ref = refs[2 + 3 * n_layers]

    # [1, C_in, L] block -> [C_in, L] -> [L, C_in]  (channels on lanes for the MXU)
    x = x_ref[0]
    h = jnp.transpose(x, (1, 0)).astype(compute_dtype)

    for li, (ksize, stride, l_out) in enumerate(layer_meta):
        w_ref = refs[1 + 3 * li]       # [K*C_in, C_out]  (im2col weight, built offline)
        sc_ref = refs[2 + 3 * li]      # [1, C_out]       (BN scale)
        sh_ref = refs[3 + 3 * li]      # [1, C_out]       (BN shift with conv bias folded)
        c_in = h.shape[1]

        # im2col: concatenate the K shifted views along the channel (lane) axis.
        pieces = []
        for k in range(ksize):
            if stride == 1:
                pieces.append(h[k:k + l_out, :])                      # static contiguous slice
            else:
                lim = k + (l_out - 1) * stride + 1
                pieces.append(jax.lax.slice(h, (k, 0), (lim, c_in), (stride, 1)))
        patches = pieces[0] if ksize == 1 else jnp.concatenate(pieces, axis=-1)  # [l_out, K*C_in]

        # Single 2D MXU matmul + fused affine (BN eval) + ReLU epilogue.
        z = jnp.dot(patches, w_ref[...].astype(compute_dtype),
                    preferred_element_type=jnp.float32)               # [l_out, C_out] f32
        z = z * sc_ref[...] + sh_ref[...]
        h = jnp.maximum(z, 0.0).astype(compute_dtype)

    # Flatten [L_last, C_last] -> [1, L_last*C_last] in row-major (l-major, channel-minor)
    # order via lane concatenation (layout-safe; no general relayout reshape needed).
    # The linear weight was permuted offline to this ordering, so this replaces the
    # transpose + channel-major flatten of the PyTorch graph.
    l_last = h.shape[0]
    flat = jnp.concatenate([h[l:l + 1, :] for l in range(l_last)], axis=-1)   # [1, L*C]

    e = jnp.dot(flat, w_lin_ref[...].astype(compute_dtype),
                preferred_element_type=jnp.float32)                   # [1, E]

    # L2 normalization: rsqrt on the EUP + eps to avoid NaN on all-zero embeddings.
    inv = jax.lax.rsqrt(jnp.sum(e * e, axis=-1, keepdims=True) + eps)
    o_ref[0] = (e * inv).astype(o_ref.dtype)


# ---------------------------------------------------------------------------
# Offline parameter preparation (run once; pure layout / algebraic folds)
# ---------------------------------------------------------------------------
def prepare_conv_layer(w_oik, bias, gamma, beta, running_mean, running_var, bn_eps):
    """PyTorch Conv1d weight [C_out, C_in, K] + bias + BN eval stats ->
    (im2col weight [K*C_in, C_out], scale [1, C_out], shift [1, C_out])."""
    c_out, c_in, k = w_oik.shape
    w2d = jnp.transpose(w_oik, (2, 1, 0)).reshape(k * c_in, c_out)    # row = k*C_in + c
    scale = gamma / jnp.sqrt(running_var + bn_eps)
    shift = beta - running_mean * scale + scale * bias                # conv bias folded in
    return w2d, scale.reshape(1, c_out).astype(jnp.float32), shift.reshape(1, c_out).astype(jnp.float32)


def prepare_linear_weight(w_torch, c_last, l_last):
    """PyTorch Linear weight [E, C_last*L_last] (channel-major columns) ->
    [L_last*C_last, E] with rows in l-major order, matching the kernel's flatten."""
    e_dim = w_torch.shape[0]
    w3 = w_torch.reshape(e_dim, c_last, l_last)           # [E, c, l]
    return jnp.transpose(w3, (2, 1, 0)).reshape(l_last * c_last, e_dim)


# ---------------------------------------------------------------------------
# Wrapper: single pallas_call for the whole forward pass
# ---------------------------------------------------------------------------
def conv1d_embedding_forward(x_ncl, prepared_conv, w_lin_perm, layer_meta, embedding_dim,
                             *, eps=1e-12, compute_dtype=jnp.float32):
    """x_ncl: [B, C_in, L] (PyTorch NCL). Returns L2-normalized embedding [B, E]."""
    B, c_in, L = x_ncl.shape

    kernel = functools.partial(_fused_embedding_kernel,
                               layer_meta=tuple(layer_meta), eps=eps,
                               compute_dtype=compute_dtype)

    in_specs = [pl.BlockSpec((1, c_in, L), lambda b: (b, 0, 0))]
    args = [x_ncl]
    for (w2d, sc, sh) in prepared_conv:
        in_specs += [pl.BlockSpec(w2d.shape, lambda b: (0, 0)),
                     pl.BlockSpec(sc.shape, lambda b: (0, 0)),
                     pl.BlockSpec(sh.shape, lambda b: (0, 0))]
        args += [w2d, sc, sh]
    in_specs.append(pl.BlockSpec(w_lin_perm.shape, lambda b: (0, 0)))
    args.append(w_lin_perm)

    out = pl.pallas_call(
        kernel,
        out_shape=jax.ShapeDtypeStruct((B, 1, embedding_dim), jnp.float32),
        grid=(B,),
        in_specs=in_specs,
        out_specs=pl.BlockSpec((1, 1, embedding_dim), lambda b: (b, 0, 0)),
        compiler_params=pltpu.CompilerParams(dimension_semantics=("parallel",)),
    )(*args)
    return out.reshape(B, embedding_dim)


# ---------------------------------------------------------------------------
# Pure-JAX reference (mirrors the PyTorch module exactly, eval mode)
# ---------------------------------------------------------------------------
def _reference_forward(x, torch_layers, lin_w, bn_eps):
    h = x
    for (w_oik, bias, gamma, beta, mean, var, stride) in torch_layers:
        _, _, l_in = h.shape
        c_out, _, k = w_oik.shape
        l_out = (l_in - k) // stride + 1
        cols = jnp.stack([h[:, :, t:t + (l_out - 1) * stride + 1:stride] for t in range(k)],
                         axis=-1)                                     # [B, C_in, L_out, K]
        out = jnp.einsum("bclk,ock->bol", cols, w_oik) + bias[None, :, None]
        scale = gamma / jnp.sqrt(var + bn_eps)
        out = (out - mean[None, :, None]) * scale[None, :, None] + beta[None, :, None]
        h = jnp.maximum(out, 0.0)
    b = h.shape[0]
    flat = h.reshape(b, -1)                                           # channel-major flatten
    e = flat @ lin_w.T
    return e / jnp.sqrt(jnp.sum(e * e, axis=-1, keepdims=True))


if __name__ == "__main__":
    # Config consistent with the PyTorch module:
    #   input_shape=[C_in=4, L=16], out_chans_per_layer=[8, 8], kernel_size=3, stride=1,
    #   embedding_dim=32, embedding_norm_ord=2, use_batch_norm=True (eval), no classifier.
    B, C_IN, L = 2, 4, 16
    OUT_CHANS = [8, 8]
    K, STRIDE = 3, 1
    EMB_DIM = 32
    BN_EPS = 1e-5

    key = jax.random.PRNGKey(0)

    torch_layers = []          # PyTorch-layout parameters
    layer_meta = []            # (kernel_size, stride, L_out) per layer
    c_prev, l_prev = C_IN, L
    for c_out in OUT_CHANS:
        key, kw, kb = jax.random.split(key, 3)
        w = jax.random.normal(kw, (c_out, c_prev, K), jnp.float32) * 0.1   # [C_out, C_in, K]
        b = jax.random.normal(kb, (c_out,), jnp.float32) * 0.1
        gamma = jnp.ones((c_out,), jnp.float32)
        beta = jnp.zeros((c_out,), jnp.float32)
        mean = jnp.zeros((c_out,), jnp.float32)          # freshly-initialized running stats
        var = jnp.ones((c_out,), jnp.float32)
        torch_layers.append((w, b, gamma, beta, mean, var, STRIDE))
        l_out = (l_prev - K) // STRIDE + 1
        layer_meta.append((K, STRIDE, l_out))
        c_prev, l_prev = c_out, l_out

    flat_dim = c_prev * l_prev                            # 8 * 12 = 96
    key, kl = jax.random.split(key)
    lin_w = jax.random.normal(kl, (EMB_DIM, flat_dim), jnp.float32) * 0.05  # torch Linear [E, F]

    key, kx = jax.random.split(key)
    x = jax.random.normal(kx, (B, C_IN, L), jnp.float32)  # PyTorch NCL input

    # Offline parameter prep (layout permutations + BN/bias folds).
    prepared_conv = [prepare_conv_layer(w, b, g, be, m, v, BN_EPS)
                     for (w, b, g, be, m, v, _) in torch_layers]
    w_lin_perm = prepare_linear_weight(lin_w, c_prev, l_prev)

    out = conv1d_embedding_forward(x, prepared_conv, w_lin_perm, layer_meta, EMB_DIM)
    out = jax.block_until_ready(out)

    ref = jax.block_until_ready(_reference_forward(x, torch_layers, lin_w, BN_EPS))

    assert out.shape == (B, EMB_DIM)
    assert bool(jnp.all(jnp.isfinite(out)))
    assert bool(jnp.allclose(jnp.linalg.norm(out, axis=-1), 1.0, atol=1e-5))
    assert bool(jnp.allclose(out, ref, atol=2e-3, rtol=2e-2))

    # TODO(synk): classifier_output() (auxiliary MLP head) is not part of forward()
    # and is therefore not implemented here.
    print("KERNEL_OK")
</pallas_src>

<mosaic_0001>
module attributes {stable_mosaic.version = 11 : i64} {
  func.func @_fused_embedding_kernel(%arg0: i32, %arg1: memref<1x4x16xf32, #tpu.memory_space<vmem>>, %arg2: memref<12x8xf32, #tpu.memory_space<vmem>>, %arg3: memref<1x8xf32, #tpu.memory_space<vmem>>, %arg4: memref<1x8xf32, #tpu.memory_space<vmem>>, %arg5: memref<24x8xf32, #tpu.memory_space<vmem>>, %arg6: memref<1x8xf32, #tpu.memory_space<vmem>>, %arg7: memref<1x8xf32, #tpu.memory_space<vmem>>, %arg8: memref<96x32xf32, #tpu.memory_space<vmem>>, %arg9: memref<1x1x32xf32, #tpu.memory_space<vmem>>) attributes {dimension_semantics = [#tpu.dimension_semantics<parallel>], iteration_bounds = array<i64: 2>, scalar_prefetch = 0 : i64, scratch_operands = 0 : i64, tpu.core_type = #tpu.core_type<tc>, window_params = [{transform_indices = @transform_0, window_bounds = array<i64: 1, 4, 16>}, {pipeline_mode = #tpu.pipeline_mode<synchronous>, transform_indices = @transform_1, window_bounds = array<i64: 12, 8>}, {pipeline_mode = #tpu.pipeline_mode<synchronous>, transform_indices = @transform_2, window_bounds = array<i64: 1, 8>}, {pipeline_mode = #tpu.pipeline_mode<synchronous>, transform_indices = @transform_3, window_bounds = array<i64: 1, 8>}, {pipeline_mode = #tpu.pipeline_mode<synchronous>, transform_indices = @transform_4, window_bounds = array<i64: 24, 8>}, {pipeline_mode = #tpu.pipeline_mode<synchronous>, transform_indices = @transform_5, window_bounds = array<i64: 1, 8>}, {pipeline_mode = #tpu.pipeline_mode<synchronous>, transform_indices = @transform_6, window_bounds = array<i64: 1, 8>}, {pipeline_mode = #tpu.pipeline_mode<synchronous>, transform_indices = @transform_7, window_bounds = array<i64: 96, 32>}, {transform_indices = @transform_8, window_bounds = array<i64: 1, 1, 32>}]} {
    %c0 = arith.constant 0 : index
    %c0_0 = arith.constant 0 : index
    %c0_1 = arith.constant 0 : index
    %0 = vector.load %arg1[%c0, %c0_0, %c0_1] : memref<1x4x16xf32, #tpu.memory_space<vmem>>, vector<1x4x16xf32>
    %1 = vector.shape_cast %0 : vector<1x4x16xf32> to vector<4x16xf32>
    %2 = tpu.transpose %1, [1, 0] : vector<4x16xf32> -> vector<16x4xf32>
    %3 = vector.extract_strided_slice %2 {offsets = [0, 0], sizes = [14, 4], strides = [1, 1]} : vector<16x4xf32> to vector<14x4xf32>
    %4 = vector.extract_strided_slice %2 {offsets = [1, 0], sizes = [14, 4], strides = [1, 1]} : vector<16x4xf32> to vector<14x4xf32>
    %5 = vector.extract_strided_slice %2 {offsets = [2, 0], sizes = [14, 4], strides = [1, 1]} : vector<16x4xf32> to vector<14x4xf32>
    %6 = tpu.concatenate %3, %4, %5 in 1 : vector<14x4xf32>, vector<14x4xf32>, vector<14x4xf32> -> vector<14x12xf32>
    %c0_2 = arith.constant 0 : index
    %c0_3 = arith.constant 0 : index
    %7 = vector.load %arg2[%c0_2, %c0_3] : memref<12x8xf32, #tpu.memory_space<vmem>>, vector<12x8xf32>
    %cst = arith.constant dense<0.000000e+00> : vector<14x8xf32>
    %8 = tpu.matmul %6, %7, %cst {dimension_numbers = #tpu.dot_dimension_numbers<[1], [0], [0], [1], [0, 0, 1, 1], [], []>} : vector<14x12xf32>, vector<12x8xf32>, vector<14x8xf32> -> vector<14x8xf32>
    %c0_4 = arith.constant 0 : index
    %c0_5 = arith.constant 0 : index
    %9 = vector.load %arg3[%c0_4, %c0_5] : memref<1x8xf32, #tpu.memory_space<vmem>>, vector<1x8xf32>
    %10 = vector.broadcast %9 : vector<1x8xf32> to vector<14x8xf32>
    %11 = arith.mulf %8, %10 : vector<14x8xf32>
    %c0_6 = arith.constant 0 : index
    %c0_7 = arith.constant 0 : index
    %12 = vector.load %arg4[%c0_6, %c0_7] : memref<1x8xf32, #tpu.memory_space<vmem>>, vector<1x8xf32>
    %13 = vector.broadcast %12 : vector<1x8xf32> to vector<14x8xf32>
    %14 = arith.addf %11, %13 : vector<14x8xf32>
    %cst_8 = arith.constant 0.000000e+00 : f32
    %15 = vector.broadcast %cst_8 : f32 to vector<14x8xf32>
    %16 = arith.maximumf %14, %15 : vector<14x8xf32>
    %17 = vector.extract_strided_slice %16 {offsets = [0, 0], sizes = [12, 8], strides = [1, 1]} : vector<14x8xf32> to vector<12x8xf32>
    %18 = vector.extract_strided_slice %16 {offsets = [1, 0], sizes = [12, 8], strides = [1, 1]} : vector<14x8xf32> to vector<12x8xf32>
    %19 = vector.extract_strided_slice %16 {offsets = [2, 0], sizes = [12, 8], strides = [1, 1]} : vector<14x8xf32> to vector<12x8xf32>
    %20 = tpu.concatenate %17, %18, %19 in 1 : vector<12x8xf32>, vector<12x8xf32>, vector<12x8xf32> -> vector<12x24xf32>
    %c0_9 = arith.constant 0 : index
    %c0_10 = arith.constant 0 : index
    %21 = vector.load %arg5[%c0_9, %c0_10] : memref<24x8xf32, #tpu.memory_space<vmem>>, vector<24x8xf32>
    %cst_11 = arith.constant dense<0.000000e+00> : vector<12x8xf32>
    %22 = tpu.matmul %20, %21, %cst_11 {dimension_numbers = #tpu.dot_dimension_numbers<[1], [0], [0], [1], [0, 0, 1, 1], [], []>} : vector<12x24xf32>, vector<24x8xf32>, vector<12x8xf32> -> vector<12x8xf32>
    %c0_12 = arith.constant 0 : index
    %c0_13 = arith.constant 0 : index
    %23 = vector.load %arg6[%c0_12, %c0_13] : memref<1x8xf32, #tpu.memory_space<vmem>>, vector<1x8xf32>
    %24 = vector.broadcast %23 : vector<1x8xf32> to vector<12x8xf32>
    %25 = arith.mulf %22, %24 : vector<12x8xf32>
    %c0_14 = arith.constant 0 : index
    %c0_15 = arith.constant 0 : index
    %26 = vector.load %arg7[%c0_14, %c0_15] : memref<1x8xf32, #tpu.memory_space<vmem>>, vector<1x8xf32>
    %27 = vector.broadcast %26 : vector<1x8xf32> to vector<12x8xf32>
    %28 = arith.addf %25, %27 : vector<12x8xf32>
    %cst_16 = arith.constant 0.000000e+00 : f32
    %29 = vector.broadcast %cst_16 : f32 to vector<12x8xf32>
    %30 = arith.maximumf %28, %29 : vector<12x8xf32>
    %31 = vector.extract_strided_slice %30 {offsets = [0, 0], sizes = [1, 8], strides = [1, 1]} : vector<12x8xf32> to vector<1x8xf32>
    %32 = vector.extract_strided_slice %30 {offsets = [1, 0], sizes = [1, 8], strides = [1, 1]} : vector<12x8xf32> to vector<1x8xf32>
    %33 = vector.extract_strided_slice %30 {offsets = [2, 0], sizes = [1, 8], strides = [1, 1]} : vector<12x8xf32> to vector<1x8xf32>
    %34 = vector.extract_strided_slice %30 {offsets = [3, 0], sizes = [1, 8], strides = [1, 1]} : vector<12x8xf32> to vector<1x8xf32>
    %35 = vector.extract_strided_slice %30 {offsets = [4, 0], sizes = [1, 8], strides = [1, 1]} : vector<12x8xf32> to vector<1x8xf32>
    %36 = vector.extract_strided_slice %30 {offsets = [5, 0], sizes = [1, 8], strides = [1, 1]} : vector<12x8xf32> to vector<1x8xf32>
    %37 = vector.extract_strided_slice %30 {offsets = [6, 0], sizes = [1, 8], strides = [1, 1]} : vector<12x8xf32> to vector<1x8xf32>
    %38 = vector.extract_strided_slice %30 {offsets = [7, 0], sizes = [1, 8], strides = [1, 1]} : vector<12x8xf32> to vector<1x8xf32>
    %39 = vector.extract_strided_slice %30 {offsets = [8, 0], sizes = [1, 8], strides = [1, 1]} : vector<12x8xf32> to vector<1x8xf32>
    %40 = vector.extract_strided_slice %30 {offsets = [9, 0], sizes = [1, 8], strides = [1, 1]} : vector<12x8xf32> to vector<1x8xf32>
    %41 = vector.extract_strided_slice %30 {offsets = [10, 0], sizes = [1, 8], strides = [1, 1]} : vector<12x8xf32> to vector<1x8xf32>
    %42 = vector.extract_strided_slice %30 {offsets = [11, 0], sizes = [1, 8], strides = [1, 1]} : vector<12x8xf32> to vector<1x8xf32>
    %43 = tpu.concatenate %31, %32, %33, %34, %35, %36, %37, %38, %39, %40, %41, %42 in 1 : vector<1x8xf32>, vector<1x8xf32>, vector<1x8xf32>, vector<1x8xf32>, vector<1x8xf32>, vector<1x8xf32>, vector<1x8xf32>, vector<1x8xf32>, vector<1x8xf32>, vector<1x8xf32>, vector<1x8xf32>, vector<1x8xf32> -> vector<1x96xf32>
    %c0_17 = arith.constant 0 : index
    %c0_18 = arith.constant 0 : index
    %44 = vector.load %arg8[%c0_17, %c0_18] : memref<96x32xf32, #tpu.memory_space<vmem>>, vector<96x32xf32>
    %cst_19 = arith.constant dense<0.000000e+00> : vector<1x32xf32>
    %45 = tpu.matmul %43, %44, %cst_19 {dimension_numbers = #tpu.dot_dimension_numbers<[1], [0], [0], [1], [0, 0, 1, 1], [], []>} : vector<1x96xf32>, vector<96x32xf32>, vector<1x32xf32> -> vector<1x32xf32>
    %46 = arith.mulf %45, %45 : vector<1x32xf32>
    %cst_20 = arith.constant dense<0.000000e+00> : vector<1xf32>
    %47 = vector.multi_reduction <add>, %46, %cst_20 [1] : vector<1x32xf32> to vector<1xf32>
    %48 = vector.shape_cast %47 : vector<1xf32> to vector<1x1xf32>
    %cst_21 = arith.constant 9.99999996E-13 : f32
    %49 = vector.broadcast %cst_21 : f32 to vector<1x1xf32>
    %50 = arith.addf %48, %49 : vector<1x1xf32>
    %51 = math.rsqrt %50 : vector<1x1xf32>
    %52 = vector.broadcast %51 : vector<1x1xf32> to vector<1x32xf32>
    %53 = arith.mulf %45, %52 : vector<1x32xf32>
    %c0_22 = arith.constant 0 : index
    %c0_23 = arith.constant 0 : index
    %c0_24 = arith.constant 0 : index
    %54 = vector.load %arg9[%c0_22, %c0_23, %c0_24] : memref<1x1x32xf32, #tpu.memory_space<vmem>>, vector<1x1x32xf32>
    %55 = vector.shape_cast %54 : vector<1x1x32xf32> to vector<1x32xf32>
    %56 = vector.shape_cast %53 : vector<1x32xf32> to vector<1x1x32xf32>
    tpu.vector_store %arg9[%c0_22, %c0_23, %c0_24], %56 {strides = array<i32>} : memref<1x1x32xf32, #tpu.memory_space<vmem>>, vector<1x1x32xf32>,
    return
  }
  func.func @transform_0(%arg0: i32) -> (i32, i32, i32) {
    %c0_i32 = arith.constant 0 : i32
    %c0_i32_0 = arith.constant 0 : i32
    %c0_i32_1 = arith.constant 0 : i32
    return %arg0, %c0_i32, %c0_i32_0 : i32, i32, i32
  }
  func.func @transform_1(%arg0: i32) -> (i32, i32) {
    %c0_i32 = arith.constant 0 : i32
    %c0_i32_0 = arith.constant 0 : i32
    %c0_i32_1 = arith.constant 0 : i32
    return %c0_i32, %c0_i32_0 : i32, i32
  }
  func.func @transform_2(%arg0: i32) -> (i32, i32) {
    %c0_i32 = arith.constant 0 : i32
    %c0_i32_0 = arith.constant 0 : i32
    %c0_i32_1 = arith.constant 0 : i32
    return %c0_i32, %c0_i32_0 : i32, i32
  }
  func.func @transform_3(%arg0: i32) -> (i32, i32) {
    %c0_i32 = arith.constant 0 : i32
    %c0_i32_0 = arith.constant 0 : i32
    %c0_i32_1 = arith.constant 0 : i32
    return %c0_i32, %c0_i32_0 : i32, i32
  }
  func.func @transform_4(%arg0: i32) -> (i32, i32) {
    %c0_i32 = arith.constant 0 : i32
    %c0_i32_0 = arith.constant 0 : i32
    %c0_i32_1 = arith.constant 0 : i32
    return %c0_i32, %c0_i32_0 : i32, i32
  }
  func.func @transform_5(%arg0: i32) -> (i32, i32) {
    %c0_i32 = arith.constant 0 : i32
    %c0_i32_0 = arith.constant 0 : i32
    %c0_i32_1 = arith.constant 0 : i32
    return %c0_i32, %c0_i32_0 : i32, i32
  }
  func.func @transform_6(%arg0: i32) -> (i32, i32) {
    %c0_i32 = arith.constant 0 : i32
    %c0_i32_0 = arith.constant 0 : i32
    %c0_i32_1 = arith.constant 0 : i32
    return %c0_i32, %c0_i32_0 : i32, i32
  }
  func.func @transform_7(%arg0: i32) -> (i32, i32) {
    %c0_i32 = arith.constant 0 : i32
    %c0_i32_0 = arith.constant 0 : i32
    %c0_i32_1 = arith.constant 0 : i32
    return %c0_i32, %c0_i32_0 : i32, i32
  }
  func.func @transform_8(%arg0: i32) -> (i32, i32, i32) {
    %c0_i32 = arith.constant 0 : i32
    %c0_i32_0 = arith.constant 0 : i32
    %c0_i32_1 = arith.constant 0 : i32
    return %arg0, %c0_i32, %c0_i32_0 : i32, i32, i32
  }
}

</mosaic_0001>

<llo_original>
// kernel: tpu_custom_call.1
$region0: #{tpu_custom_call.1}
  #allocation0 [shape = 'u32[]', space=smem, size = 0x4, offset = 0x4, fixed_abs, tag = 'smem constant byte address 0x4 - core index']
  #allocation1 [shape = 'u32[144,128]{1,0:T(1,128)}', space=vmem, size = 0x12000, scoped, tag = 'internal scratch']
  %s0 = inlined_call_operand.vmem [shape: f32[2,4,16], index: 0, kind: input, shape index: {}]
  %s1 = inlined_call_operand.vmem [shape: f32[12,8], index: 1, kind: input, shape index: {}]
  %s2 = inlined_call_operand.vmem [shape: f32[1,8], index: 2, kind: input, shape index: {}]
  %s3 = inlined_call_operand.vmem [shape: f32[1,8], index: 3, kind: input, shape index: {}]
  %s4 = inlined_call_operand.vmem [shape: f32[24,8], index: 4, kind: input, shape index: {}]
  %s5 = inlined_call_operand.vmem [shape: f32[1,8], index: 5, kind: input, shape index: {}]
  %s6 = inlined_call_operand.vmem [shape: f32[1,8], index: 6, kind: input, shape index: {}]
  %s7 = inlined_call_operand.vmem [shape: f32[96,32], index: 7, kind: input, shape index: {}]
  %s8 = inlined_call_operand.hbm [shape: f32[2,1,32], index: 8, kind: output, shape index: {}]
  %s9 = sld [smem:[#allocation0]]
  $region65: #{tpu_custom_call.1} parent=0
    _
  %s11 = ssub.s32 1, %s9
  %s12 = scalar_select 0, %s11, %s9
  $region1: #{tpu_custom_call.1} parent=0
    #allocation2 [shape = 'u8[1024]{0}', space=vmem, size = 0x400, scoped, tag = 'output window, operand 0']
    #allocation3 [shape = 's32[2]{0}', space=sflag, size = 0x8, scoped, tag = 'scoped memory for tpu_custom_call.1']
    %13 = vsyncpa [#allocation3], 0
    %s14 = scalar_lea.sflag [#allocation3], 1
    %15 = vsyncpa %s14, 0
    loop: start=0, step=1, limit=4
    $region2: #{tpu_custom_call.1} parent=1 // loop_pre_header
      _
    $region3: #{tpu_custom_call.1} parent=1 // loop_header
      %s17 = sphi 0, %s21
      %p18 = scmp.ge.s32.totalorder %s17, 4
      %s27 = sphi 0, %s29
      %s30 = sphi 0, %s27
      %s31 = sphi 0, %s30
      %s47 = sphi 0, %s31
      %s51 = sphi 0, %s51
      %s53 = sphi 0, %s51
      %s54 = sphi 0, %s53
      %s68 = sphi 0, %s54
      %s72 = sphi 0, %s72
      %s74 = sphi 0, %s72
      %s75 = sphi 0, %s74
      %s89 = sphi 0, %s75
      %s93 = sphi 0, %s93
      %s95 = sphi 0, %s93
      %s96 = sphi 0, %s95
      %s110 = sphi 0, %s96
      %s114 = sphi 0, %s114
      %s116 = sphi 0, %s114
      %s117 = sphi 0, %s116
      %s131 = sphi 0, %s117
      %s135 = sphi 0, %s135
      %s137 = sphi 0, %s135
      %s138 = sphi 0, %s137
      %s152 = sphi 0, %s138
      %s156 = sphi 0, %s156
      %s158 = sphi 0, %s156
      %s159 = sphi 0, %s158
      %s173 = sphi 0, %s159
      %s177 = sphi 0, %s177
      %s179 = sphi 0, %s177
      %s180 = sphi 0, %s179
      %s194 = sphi 0, %s180
      %s200 = sphi 0, %s202
      %s203 = sphi 0, %s200
      %s204 = sphi 0, %s203
      %s220 = sphi 0, %s204
    $region4: #{tpu_custom_call.1} parent=1 // loop_header_branch
      %20 = sbr.rel (%p18) target = $region8
    $region5: #{tpu_custom_call.1} parent=1 // loop_body
      %s22 = ssub.s32 %s17, 1
      %s23 = ssub.s32 %s17, 2
      %s24 = sadd.s32 %s17, 1
      %s25 = ssub.s32 %s17, %s24
      %p26 = scmp.eq.s32.totalorder %s25, 0
      %s28 = sadd.s32 %s27, 1
      %s29 = scalar_select %p26, %s27, %s28
      %p32 = pneg %p26
      %p33 = scmp.eq.s32.totalorder %s17, 1
      %p34 = por %p32, %p33
      %p35 = scmp.ne.s32.totalorder %s27, %s30
      %p36 = scmp.eq.s32.totalorder %s17, 0
      %p37 = por %p35, %p36
      %p38 = scmp.ne.s32.totalorder %s27, %s30
      %p39 = scmp.eq.s32.totalorder %s22, 1
      %p40 = por %p38, %p39
      %p41 = scmp.ne.s32.totalorder %s30, %s31
      %p42 = scmp.eq.s32.totalorder %s22, 0
      %p43 = por %p41, %p42
      %p44 = scmp.ne.s32.totalorder %s30, %s31
      %p45 = scmp.eq.s32.totalorder %s23, 1
      %p46 = por %p44, %p45
      %p48 = scmp.ne.s32.totalorder %s31, %s47
      %p49 = scmp.eq.s32.totalorder %s23, 0
      %p50 = por %p48, %p49
      %s52 = sadd.s32 %s51, 1
      %p55 = scmp.eq.s32.totalorder %s17, 1
      %p56 = scmp.ne.s32.totalorder %s51, %s53
      %p57 = scmp.eq.s32.totalorder %s17, 0
      %p58 = por %p56, %p57
      %p59 = scmp.ne.s32.totalorder %s51, %s53
      %p60 = scmp.eq.s32.totalorder %s22, 1
      %p61 = por %p59, %p60
      %p62 = scmp.ne.s32.totalorder %s53, %s54
      %p63 = scmp.eq.s32.totalorder %s22, 0
      %p64 = por %p62, %p63
      %p65 = scmp.ne.s32.totalorder %s53, %s54
      %p66 = scmp.eq.s32.totalorder %s23, 1
      %p67 = por %p65, %p66
      %p69 = scmp.ne.s32.totalorder %s54, %s68
      %p70 = scmp.eq.s32.totalorder %s23, 0
      %p71 = por %p69, %p70
      %s73 = sadd.s32 %s72, 1
      %p76 = scmp.eq.s32.totalorder %s17, 1
      %p77 = scmp.ne.s32.totalorder %s72, %s74
      %p78 = scmp.eq.s32.totalorder %s17, 0
      %p79 = por %p77, %p78
      %p80 = scmp.ne.s32.totalorder %s72, %s74
      %p81 = scmp.eq.s32.totalorder %s22, 1
      %p82 = por %p80, %p81
      %p83 = scmp.ne.s32.totalorder %s74, %s75
      %p84 = scmp.eq.s32.totalorder %s22, 0
      %p85 = por %p83, %p84
      %p86 = scmp.ne.s32.totalorder %s74, %s75
      %p87 = scmp.eq.s32.totalorder %s23, 1
      %p88 = por %p86, %p87
      %p90 = scmp.ne.s32.totalorder %s75, %s89
      %p91 = scmp.eq.s32.totalorder %s23, 0
      %p92 = por %p90, %p91
      %s94 = sadd.s32 %s93, 1
      %p97 = scmp.eq.s32.totalorder %s17, 1
      %p98 = scmp.ne.s32.totalorder %s93, %s95
      %p99 = scmp.eq.s32.totalorder %s17, 0
      %p100 = por %p98, %p99
      %p101 = scmp.ne.s32.totalorder %s93, %s95
      %p102 = scmp.eq.s32.totalorder %s22, 1
      %p103 = por %p101, %p102
      %p104 = scmp.ne.s32.totalorder %s95, %s96
      %p105 = scmp.eq.s32.totalorder %s22, 0
      %p106 = por %p104, %p105
      %p107 = scmp.ne.s32.totalorder %s95, %s96
      %p108 = scmp.eq.s32.totalorder %s23, 1
      %p109 = por %p107, %p108
      %p111 = scmp.ne.s32.totalorder %s96, %s110
      %p112 = scmp.eq.s32.totalorder %s23, 0
      %p113 = por %p111, %p112
      %s115 = sadd.s32 %s114, 1
      %p118 = scmp.eq.s32.totalorder %s17, 1
      %p119 = scmp.ne.s32.totalorder %s114, %s116
      %p120 = scmp.eq.s32.totalorder %s17, 0
      %p121 = por %p119, %p120
      %p122 = scmp.ne.s32.totalorder %s114, %s116
      %p123 = scmp.eq.s32.totalorder %s22, 1
      %p124 = por %p122, %p123
      %p125 = scmp.ne.s32.totalorder %s116, %s117
      %p126 = scmp.eq.s32.totalorder %s22, 0
      %p127 = por %p125, %p126
      %p128 = scmp.ne.s32.totalorder %s116, %s117
      %p129 = scmp.eq.s32.totalorder %s23, 1
      %p130 = por %p128, %p129
      %p132 = scmp.ne.s32.totalorder %s117, %s131
      %p133 = scmp.eq.s32.totalorder %s23, 0
      %p134 = por %p132, %p133
      %s136 = sadd.s32 %s135, 1
      %p139 = scmp.eq.s32.totalorder %s17, 1
      %p140 = scmp.ne.s32.totalorder %s135, %s137
      %p141 = scmp.eq.s32.totalorder %s17, 0
      %p142 = por %p140, %p141
      %p143 = scmp.ne.s32.totalorder %s135, %s137
      %p144 = scmp.eq.s32.totalorder %s22, 1
      %p145 = por %p143, %p144
      %p146 = scmp.ne.s32.totalorder %s137, %s138
      %p147 = scmp.eq.s32.totalorder %s22, 0
      %p148 = por %p146, %p147
      %p149 = scmp.ne.s32.totalorder %s137, %s138
      %p150 = scmp.eq.s32.totalorder %s23, 1
      %p151 = por %p149, %p150
      %p153 = scmp.ne.s32.totalorder %s138, %s152
      %p154 = scmp.eq.s32.totalorder %s23, 0
      %p155 = por %p153, %p154
      %s157 = sadd.s32 %s156, 1
      %p160 = scmp.eq.s32.totalorder %s17, 1
      %p161 = scmp.ne.s32.totalorder %s156, %s158
      %p162 = scmp.eq.s32.totalorder %s17, 0
      %p163 = por %p161, %p162
      %p164 = scmp.ne.s32.totalorder %s156, %s158
      %p165 = scmp.eq.s32.totalorder %s22, 1
      %p166 = por %p164, %p165
      %p167 = scmp.ne.s32.totalorder %s158, %s159
      %p168 = scmp.eq.s32.totalorder %s22, 0
      %p169 = por %p167, %p168
      %p170 = scmp.ne.s32.totalorder %s158, %s159
      %p171 = scmp.eq.s32.totalorder %s23, 1
      %p172 = por %p170, %p171
      %p174 = scmp.ne.s32.totalorder %s159, %s173
      %p175 = scmp.eq.s32.totalorder %s23, 0
      %p176 = por %p174, %p175
      %s178 = sadd.s32 %s177, 1
      %p181 = scmp.eq.s32.totalorder %s17, 1
      %p182 = scmp.ne.s32.totalorder %s177, %s179
      %p183 = scmp.eq.s32.totalorder %s17, 0
      %p184 = por %p182, %p183
      %p185 = scmp.ne.s32.totalorder %s177, %s179
      %p186 = scmp.eq.s32.totalorder %s22, 1
      %p187 = por %p185, %p186
      %p188 = scmp.ne.s32.totalorder %s179, %s180
      %p189 = scmp.eq.s32.totalorder %s22, 0
      %p190 = por %p188, %p189
      %p191 = scmp.ne.s32.totalorder %s179, %s180
      %p192 = scmp.eq.s32.totalorder %s23, 1
      %p193 = por %p191, %p192
      %p195 = scmp.ne.s32.totalorder %s180, %s194
      %p196 = scmp.eq.s32.totalorder %s23, 0
      %p197 = por %p195, %p196
      %s198 = ssub.s32 %s17, %s24
      %p199 = scmp.eq.s32.totalorder %s198, 0
      %s201 = sadd.s32 %s200, 1
      %s202 = scalar_select %p199, %s200, %s201
      %p205 = pneg %p199
      %p206 = scmp.eq.s32.totalorder %s17, 1
      %p207 = por %p205, %p206
      %p208 = scmp.ne.s32.totalorder %s200, %s203
      %p209 = scmp.eq.s32.totalorder %s17, 0
      %p210 = por %p208, %p209
      %p211 = scmp.ne.s32.totalorder %s200, %s203
      %p212 = scmp.eq.s32.totalorder %s22, 1
      %p213 = por %p211, %p212
      %p214 = scmp.ne.s32.totalorder %s203, %s204
      %p215 = scmp.eq.s32.totalorder %s22, 0
      %p216 = por %p214, %p215
      %p217 = scmp.ne.s32.totalorder %s203, %s204
      %p218 = scmp.eq.s32.totalorder %s23, 1
      %p219 = por %p217, %p218
      %p221 = scmp.ne.s32.totalorder %s204, %s220
      %p222 = scmp.eq.s32.totalorder %s23, 0
      %p223 = por %p221, %p222
      %p224 = scmp.le.s32.totalorder 1, %s17
      %p225 = scmp.lt.s32.totalorder %s17, 3
      %p226 = pnand %p224, %p225
      %p227 = pneg %p226
      // Predicated region
      $region9: #{tpu_custom_call.1} parent=5 // pred_check
        _
      $region10: #{tpu_custom_call.1} parent=5 // pred_check_branch
        %229 = sbr.rel (%p226) target = $region12
      $region11: #{tpu_custom_call.1} parent=5 // pred_region
        %s230 = ssub.s32 %s17, 1
        // Predicated region
        $region13: #{tpu_custom_call.1} parent=11 // pred_check
          %p231 = pneg %p64
        $region14: #{tpu_custom_call.1} parent=11 // pred_check_branch
          %233 = sbr.rel (%p231) target = $region16
        $region15: #{tpu_custom_call.1} parent=11 // pred_region
          _
        $region16: #{tpu_custom_call.1} parent=11 // pred_fallthru
          _
        // Predicated region
        $region17: #{tpu_custom_call.1} parent=11 // pred_check
          %p234 = pneg %p85
        $region18: #{tpu_custom_call.1} parent=11 // pred_check_branch
          %236 = sbr.rel (%p234) target = $region20
        $region19: #{tpu_custom_call.1} parent=11 // pred_region
          _
        $region20: #{tpu_custom_call.1} parent=11 // pred_fallthru
          _
        // Predicated region
        $region21: #{tpu_custom_call.1} parent=11 // pred_check
          %p237 = pneg %p106
        $region22: #{tpu_custom_call.1} parent=11 // pred_check_branch
          %239 = sbr.rel (%p237) target = $region24
        $region23: #{tpu_custom_call.1} parent=11 // pred_region
          _
        $region24: #{tpu_custom_call.1} parent=11 // pred_fallthru
          _
        // Predicated region
        $region25: #{tpu_custom_call.1} parent=11 // pred_check
          %p240 = pneg %p127
        $region26: #{tpu_custom_call.1} parent=11 // pred_check_branch
          %242 = sbr.rel (%p240) target = $region28
        $region27: #{tpu_custom_call.1} parent=11 // pred_region
          _
        $region28: #{tpu_custom_call.1} parent=11 // pred_fallthru
          _
        // Predicated region
        $region29: #{tpu_custom_call.1} parent=11 // pred_check
          %p243 = pneg %p148
        $region30: #{tpu_custom_call.1} parent=11 // pred_check_branch
          %245 = sbr.rel (%p243) target = $region32
        $region31: #{tpu_custom_call.1} parent=11 // pred_region
          _
        $region32: #{tpu_custom_call.1} parent=11 // pred_fallthru
          _
        // Predicated region
        $region33: #{tpu_custom_call.1} parent=11 // pred_check
          %p246 = pneg %p169
        $region34: #{tpu_custom_call.1} parent=11 // pred_check_branch
          %248 = sbr.rel (%p246) target = $region36
        $region35: #{tpu_custom_call.1} parent=11 // pred_region
          _
        $region36: #{tpu_custom_call.1} parent=11 // pred_fallthru
          _
        // Predicated region
        $region37: #{tpu_custom_call.1} parent=11 // pred_check
          %p249 = pneg %p190
        $region38: #{tpu_custom_call.1} parent=11 // pred_check_branch
          %251 = sbr.rel (%p249) target = $region40
        $region39: #{tpu_custom_call.1} parent=11 // pred_region
          _
        $region40: #{tpu_custom_call.1} parent=11 // pred_fallthru
          _
      $region12: #{tpu_custom_call.1} parent=5 // pred_fallthru
        _
      %p252 = scmp.lt.s32.totalorder %s17, 2
      // Predicated region
      $region41: #{tpu_custom_call.1} parent=5 // pred_check
        %p253 = pneg %p252
      $region42: #{tpu_custom_call.1} parent=5 // pred_check_branch
        %255 = sbr.rel (%p253) target = $region44
      $region43: #{tpu_custom_call.1} parent=5 // pred_region
        // Predicated region
        $region45: #{tpu_custom_call.1} parent=43 // pred_check
          %p256 = pneg %p37
        $region46: #{tpu_custom_call.1} parent=43 // pred_check_branch
          %258 = sbr.rel (%p256) target = $region48
        $region47: #{tpu_custom_call.1} parent=43 // pred_region
          %p259 = scmp.lt.s32.totalorder %s17, 1
          %s260 = scalar_select %p259, %s17, 1
          %s261 = smul.addr %s260, 4
          %s262 = scalar_lea.vmem %s0, %s261
        $region48: #{tpu_custom_call.1} parent=43 // pred_fallthru
          _
      $region44: #{tpu_custom_call.1} parent=5 // pred_fallthru
        _
      %p263 = scmp.le.s32.totalorder 1, %s17
      %p264 = scmp.lt.s32.totalorder %s17, 3
      %p265 = pnand %p263, %p264
      %p266 = pneg %p265
      // Predicated region
      $region49: #{tpu_custom_call.1} parent=5 // pred_check
        _
      $region50: #{tpu_custom_call.1} parent=5 // pred_check_branch
        %268 = sbr.rel (%p265) target = $region52
      $region51: #{tpu_custom_call.1} parent=5 // pred_region
        %s269 = ssub.s32 %s17, 1
        %p270 = scmp.lt.s32.totalorder %s22, 1
        %s271 = scalar_select %p270, %s22, 1
        %s272 = smul.addr %s271, 4
        %s273 = scalar_lea.vmem %s0, %s272
        %p274 = pneg %p43
        %p275 = pneg %p40
        %p276 = pneg %p64
        %p277 = pneg %p61
        %p278 = pneg %p85
        %p279 = pneg %p82
        %p280 = pneg %p106
        %p281 = pneg %p103
        %p282 = pneg %p127
        %p283 = pneg %p124
        %p284 = pneg %p148
        %p285 = pneg %p145
        %p286 = pneg %p169
        %p287 = pneg %p166
        %p288 = pneg %p190
        %p289 = pneg %p187
        %p290 = pneg %p216
        %p291 = pneg %p213
        %s292 = sand.u32 %s203, 1
        %s293 = scalar_lea.sflag [#allocation3], %s292
        %s294 = sand.u32 %s203, 1
        %s295 = scalar_lea.vmem [#allocation2], %s294
        %p296 = scmp.lt.s32.totalorder %s22, 1
        %s297 = scalar_select %p296, %s22, 1
        %s298 = smul.addr %s297, 4
        %s299 = scalar_lea.vmem %s0, %s298
        %v300 = vld [vmem:[%s299] sm:$0xf]
        %301 = vxpose.xlu0.b32.start [1/16] %v300, 128
        %302 = vxpose.xlu0.b32.cont [2/16] 0.0, 128
        %303 = vxpose.xlu0.b32.cont [3/16] 0.0, 128
        %304 = vxpose.xlu0.b32.cont [4/16] 0.0, 128
        %305 = vxpose.xlu0.b32.cont [5/16] 0.0, 128
        %306 = vxpose.xlu0.b32.cont [6/16] 0.0, 128
        %307 = vxpose.xlu0.b32.cont [7/16] 0.0, 128
        %308 = vxpose.xlu0.b32.cont [8/16] 0.0, 128
        %309 = vxpose.xlu0.b32.cont [9/16] 0.0, 128
        %310 = vxpose.xlu0.b32.cont [10/16] 0.0, 128
        %311 = vxpose.xlu0.b32.cont [11/16] 0.0, 128
        %312 = vxpose.xlu0.b32.cont [12/16] 0.0, 128
        %313 = vxpose.xlu0.b32.cont [13/16] 0.0, 128
        %314 = vxpose.xlu0.b32.cont [14/16] 0.0, 128
        %315 = vxpose.xlu0.b32.cont [15/16] 0.0, 128
        %316 = vxpose.xlu0.b32.end [16/16] 0.0, 128
        %v317 = vpop.trf.xlu0
        %v318 = vpop.trf.xlu0
        %v319 = vpop.trf.xlu0
        %v320 = vpop.trf.xlu0
        %v321 = vpop.trf.xlu0
        %v322 = vpop.trf.xlu0
        %v323 = vpop.trf.xlu0
        %v324 = vpop.trf.xlu0
        %v325 = vpop.trf.xlu0
        %v326 = vpop.trf.xlu0
        %v327 = vpop.trf.xlu0
        %v328 = vpop.trf.xlu0
        %v329 = vpop.trf.xlu0
        %v330 = vpop.trf.xlu0
        %v331 = vpop.trf.xlu0
        %v332 = vpop.trf.xlu0
        %vm335 = vcmask 1046528
        %v336 = vrot.slane %v317, 1
        %v337 = vrot.slane %v318, 1
        %v338 = vsel %vm335, %v336, %v337
        %339 = vrot.lane.b32.xlu0 %v338, 4
        %v340 = vpop.permute.xlu0 %339
        %341 = vrot.lane.b32.xlu0 %v337, 4
        %v342 = vpop.permute.xlu0 %341
        %vm345 = vcmask 1045504
        %v346 = vrot.slane %v317, 2
        %v347 = vrot.slane %v318, 2
        %v348 = vsel %vm345, %v346, %v347
        %349 = vrot.lane.b32.xlu0 %v348, 8
        %v350 = vpop.permute.xlu0 %349
        %351 = vrot.lane.b32.xlu0 %v347, 8
        %v352 = vpop.permute.xlu0 %351
        %vm355 = vcmask 31744
        %v356 = vsel %vm355, %v317, %v340
        %v357 = vsel %vm355, %v318, %v342
        %vm358 = vcmask 64512
        %v359 = vsel %vm358, %v356, %v350
        %v360 = vsel %vm358, %v357, %v352
        %v361 = vld [vmem:[%s1] sm:$0xff]
        %v362 = vld [vmem:[%s1 + $0x8] sm:$0xf]
        %vm363 = vcmask 97280
        %v365 = vsel %vm363, %v359, 0
        %v368 = vsel %vm363, %v360, 0
        %vm370 = vcmask 1043456
        %v372 = vsel %vm370, %v362, 0
        %374 = vmatprep.subr.mxu0 0.0
        %375 = vmatpush1.msra.mxu0 0.0
        %376 = vmatprep.subr.mxu0 0.0
        %377 = vmatpush1.msra.mxu0 0.0
        %378 = vmatprep.subr.mxu0 0.0
        %379 = vmatpush1.msra.mxu0 0.0
        %380 = vmatprep.subr.mxu0 0.0
        %381 = vmatpush1.msra.mxu0 0.0
        %382 = vmatprep.subr.mxu0 0.0
        %383 = vmatpush1.msra.mxu0 0.0
        %384 = vmatprep.subr.mxu0 0.0
        %385 = vmatpush1.msra.mxu0 0.0
        %386 = vmatprep.subr.mxu0 0.0
        %387 = vmatpush1.msra.mxu0 0.0
        %388 = vmatprep.subr.mxu0 0.0
        %389 = vmatpush1.msra.mxu0 0.0
        %390 = vmatprep.subr.mxu0 0.0
        %391 = vmatpush1.msra.mxu0 0.0
        %392 = vmatprep.subr.mxu0 0.0
        %393 = vmatpush1.msra.mxu0 0.0
        %394 = vmatprep.subr.mxu0 0.0
        %395 = vmatpush1.msra.mxu0 0.0
        %396 = vmatprep.subr.mxu0 0.0
        %397 = vmatpush1.msra.mxu0 0.0
        %398 = vmatprep.subr.mxu0 0.0
        %399 = vmatpush1.msra.mxu0 0.0
        %400 = vmatprep.subr.mxu0 0.0
        %401 = vmatpush1.msra.mxu0 0.0
        %402 = vmatprep.subr.mxu0 0.0
        %403 = vmatpush1.msra.mxu0 %v372
        %404 = vmatprep.subr.mxu0 0.0
        %405 = vmatpush1.msra.mxu0 %v361
        %406 = vmatprep.subr.mxu0 0.0
        %407 = vmatpush2.msra.mxu0 0.0
        %408 = vmatprep.subr.mxu0 0.0
        %409 = vmatpush2.msra.mxu0 0.0
        %410 = vmatprep.subr.mxu0 0.0
        %411 = vmatpush2.msra.mxu0 0.0
        %412 = vmatprep.subr.mxu0 0.0
        %413 = vmatpush2.msra.mxu0 0.0
        %414 = vmatprep.subr.mxu0 0.0
        %415 = vmatpush2.msra.mxu0 0.0
        %416 = vmatprep.subr.mxu0 0.0
        %417 = vmatpush2.msra.mxu0 0.0
        %418 = vmatprep.subr.mxu0 0.0
        %419 = vmatpush2.msra.mxu0 0.0
        %420 = vmatprep.subr.mxu0 0.0
        %421 = vmatpush2.msra.mxu0 0.0
        %422 = vmatprep.subr.mxu0 0.0
        %423 = vmatpush2.msra.mxu0 0.0
        %424 = vmatprep.subr.mxu0 0.0
        %425 = vmatpush2.msra.mxu0 0.0
        %426 = vmatprep.subr.mxu0 0.0
        %427 = vmatpush2.msra.mxu0 0.0
        %428 = vmatprep.subr.mxu0 0.0
        %429 = vmatpush2.msra.mxu0 0.0
        %430 = vmatprep.subr.mxu0 0.0
        %431 = vmatpush2.msra.mxu0 0.0
        %432 = vmatprep.subr.mxu0 0.0
        %433 = vmatpush2.msra.mxu0 0.0
        %434 = vmatprep.subr.mxu0 0.0
        %435 = vmatpush2.msra.mxu0 0.0
        %436 = vmatprep.subr.mxu0 0.0
        %437 = vmatpush2.msra.mxu0 0.0
        %438 = vmatprep.mubr.f32.mxu0 0.0
        %439 = vmatmul.mubr.f32.gmra.mxu0 %v365
        %v440 = vpop.f32.mrf.mxu0
        %v441 = vadd.f32 0.0, %v440
        %v442 = vpop.f32.mrf.mxu0
        %443 = vmatprep.mubr.f32.mxu0 0.0
        %444 = vmatmul.mubr.f32.gmra.mxu0 %v368
        %v445 = vpop.f32.mrf.mxu0
        %v446 = vadd.f32 0.0, %v445
        %v447 = vpop.f32.mrf.mxu0
        %448 = vdwg.mxu0
        %v449 = vld [vmem:[%s2] sm:$0x1]
        %v451 = vlaneseq
        %v452 = vshrl.u32 %v451, 7
        %v453 = vsub.s32 0, %v452
        %v454 = vrot.slane %v449, %v453
        %v456 = vmul.f32 %v441, %v454
        %v457 = vmul.f32 %v446, %v454
        %v458 = vld [vmem:[%s3] sm:$0x1]
        %v460 = vlaneseq
        %v461 = vshrl.u32 %v460, 7
        %v462 = vsub.s32 0, %v461
        %v463 = vrot.slane %v458, %v462
        %v465 = vadd.f32 %v456, %v463
        %v466 = vadd.f32 %v457, %v463
        %v467 = vmax.f32 %v465, 0.0
        %v468 = vmax.f32 %v466, 0.0
        %v471 = vrot.slane %v467, 1
        %v472 = vrot.slane %v468, 1
        %v473 = vsel %vm335, %v471, %v472
        %474 = vrot.lane.b32.xlu0 %v473, 8
        %v475 = vpop.permute.xlu0 %474
        %476 = vrot.lane.b32.xlu0 %v472, 8
        %v477 = vpop.permute.xlu0 %476
        %v480 = vrot.slane %v467, 2
        %v481 = vrot.slane %v468, 2
        %v482 = vsel %vm345, %v480, %v481
        %483 = vrot.lane.b32.xlu0 %v482, 16
        %v484 = vpop.permute.xlu0 %483
        %485 = vrot.lane.b32.xlu0 %v481, 16
        %v486 = vpop.permute.xlu0 %485
        %v489 = vsel %vm358, %v467, %v475
        %v490 = vsel %vm358, %v468, %v477
        %vm491 = vcmask 130048
        %v492 = vsel %vm491, %v489, %v484
        %v493 = vsel %vm491, %v490, %v486
        %v494 = vld [vmem:[%s4] sm:$0xff]
        %v495 = vld [vmem:[%s4 + $0x8] sm:$0xff]
        %v496 = vld [vmem:[%s4 + $0x10] sm:$0xff]
        %vm497 = vcmask 195584
        %v499 = vsel %vm497, %v492, 0
        %v502 = vsel %vm497, %v493, 0
        %504 = vmatprep.subr.mxu0 0.0
        %505 = vmatpush1.msra.mxu0 0.0
        %506 = vmatprep.subr.mxu0 0.0
        %507 = vmatpush1.msra.mxu0 0.0
        %508 = vmatprep.subr.mxu0 0.0
        %509 = vmatpush1.msra.mxu0 0.0
        %510 = vmatprep.subr.mxu0 0.0
        %511 = vmatpush1.msra.mxu0 0.0
        %512 = vmatprep.subr.mxu0 0.0
        %513 = vmatpush1.msra.mxu0 0.0
        %514 = vmatprep.subr.mxu0 0.0
        %515 = vmatpush1.msra.mxu0 0.0
        %516 = vmatprep.subr.mxu0 0.0
        %517 = vmatpush1.msra.mxu0 0.0
        %518 = vmatprep.subr.mxu0 0.0
        %519 = vmatpush1.msra.mxu0 0.0
        %520 = vmatprep.subr.mxu0 0.0
        %521 = vmatpush1.msra.mxu0 0.0
        %522 = vmatprep.subr.mxu0 0.0
        %523 = vmatpush1.msra.mxu0 0.0
        %524 = vmatprep.subr.mxu0 0.0
        %525 = vmatpush1.msra.mxu0 0.0
        %526 = vmatprep.subr.mxu0 0.0
        %527 = vmatpush1.msra.mxu0 0.0
        %528 = vmatprep.subr.mxu0 0.0
        %529 = vmatpush1.msra.mxu0 0.0
        %530 = vmatprep.subr.mxu0 0.0
        %531 = vmatpush1.msra.mxu0 %v496
        %532 = vmatprep.subr.mxu0 0.0
        %533 = vmatpush1.msra.mxu0 %v495
        %534 = vmatprep.subr.mxu0 0.0
        %535 = vmatpush1.msra.mxu0 %v494
        %536 = vmatprep.subr.mxu0 0.0
        %537 = vmatpush2.msra.mxu0 0.0
        %538 = vmatprep.subr.mxu0 0.0
        %539 = vmatpush2.msra.mxu0 0.0
        %540 = vmatprep.subr.mxu0 0.0
        %541 = vmatpush2.msra.mxu0 0.0
        %542 = vmatprep.subr.mxu0 0.0
        %543 = vmatpush2.msra.mxu0 0.0
        %544 = vmatprep.subr.mxu0 0.0
        %545 = vmatpush2.msra.mxu0 0.0
        %546 = vmatprep.subr.mxu0 0.0
        %547 = vmatpush2.msra.mxu0 0.0
        %548 = vmatprep.subr.mxu0 0.0
        %549 = vmatpush2.msra.mxu0 0.0
        %550 = vmatprep.subr.mxu0 0.0
        %551 = vmatpush2.msra.mxu0 0.0
        %552 = vmatprep.subr.mxu0 0.0
        %553 = vmatpush2.msra.mxu0 0.0
        %554 = vmatprep.subr.mxu0 0.0
        %555 = vmatpush2.msra.mxu0 0.0
        %556 = vmatprep.subr.mxu0 0.0
        %557 = vmatpush2.msra.mxu0 0.0
        %558 = vmatprep.subr.mxu0 0.0
        %559 = vmatpush2.msra.mxu0 0.0
        %560 = vmatprep.subr.mxu0 0.0
        %561 = vmatpush2.msra.mxu0 0.0
        %562 = vmatprep.subr.mxu0 0.0
        %563 = vmatpush2.msra.mxu0 0.0
        %564 = vmatprep.subr.mxu0 0.0
        %565 = vmatpush2.msra.mxu0 0.0
        %566 = vmatprep.subr.mxu0 0.0
        %567 = vmatpush2.msra.mxu0 0.0
        %568 = vmatprep.mubr.f32.mxu0 0.0
        %569 = vmatmul.mubr.f32.gmra.mxu0 %v499
        %v570 = vpop.f32.mrf.mxu0
        %v571 = vadd.f32 0.0, %v570
        %v572 = vpop.f32.mrf.mxu0
        %573 = vmatprep.mubr.f32.mxu0 0.0
        %574 = vmatmul.mubr.f32.gmra.mxu0 %v502
        %v575 = vpop.f32.mrf.mxu0
        %v576 = vadd.f32 0.0, %v575
        %v577 = vpop.f32.mrf.mxu0
        %578 = vdwg.mxu0
        %v579 = vld [vmem:[%s5] sm:$0x1]
        %v581 = vlaneseq
        %v582 = vshrl.u32 %v581, 7
        %v583 = vsub.s32 0, %v582
        %v584 = vrot.slane %v579, %v583
        %v586 = vmul.f32 %v571, %v584
        %v587 = vmul.f32 %v576, %v584
        %v588 = vld [vmem:[%s6] sm:$0x1]
        %v590 = vlaneseq
        %v591 = vshrl.u32 %v590, 7
        %v592 = vsub.s32 0, %v591
        %v593 = vrot.slane %v588, %v592
        %v595 = vadd.f32 %v586, %v593
        %v596 = vadd.f32 %v587, %v593
        %v597 = vmax.f32 %v595, 0.0
        %v598 = vmax.f32 %v596, 0.0
        %v600 = vrot.slane %v597, 1
        %601 = vrot.lane.b32.xlu0 %v600, 8
        %v602 = vpop.permute.xlu0 %601
        %v604 = vrot.slane %v597, 2
        %605 = vrot.lane.b32.xlu0 %v604, 16
        %v606 = vpop.permute.xlu0 %605
        %v608 = vrot.slane %v597, 3
        %609 = vrot.lane.b32.xlu0 %v608, 24
        %v610 = vpop.permute.xlu0 %609
        %v612 = vrot.slane %v597, 4
        %613 = vrot.lane.b32.xlu0 %v612, 32
        %v614 = vpop.permute.xlu0 %613
        %v616 = vrot.slane %v597, 5
        %617 = vrot.lane.b32.xlu0 %v616, 40
        %v618 = vpop.permute.xlu0 %617
        %v620 = vrot.slane %v597, 6
        %621 = vrot.lane.b32.xlu0 %v620, 48
        %v622 = vpop.permute.xlu0 %621
        %v624 = vrot.slane %v597, 7
        %625 = vrot.lane.b32.xlu0 %v624, 56
        %v626 = vpop.permute.xlu0 %625
        %629 = vrot.lane.b32.xlu0 %v598, 64
        %v630 = vpop.permute.xlu0 %629
        %v632 = vrot.slane %v598, 1
        %633 = vrot.lane.b32.xlu0 %v632, 72
        %v634 = vpop.permute.xlu0 %633
        %v636 = vrot.slane %v598, 2
        %637 = vrot.lane.b32.xlu0 %v636, 80
        %v638 = vpop.permute.xlu0 %637
        %v640 = vrot.slane %v598, 3
        %641 = vrot.lane.b32.xlu0 %v640, 88
        %v642 = vpop.permute.xlu0 %641
        %v644 = vsel %vm358, %v597, %v602
        %v645 = vsel %vm491, %v644, %v606
        %v646 = vsel %vm497, %v645, %v610
        %vm647 = vcmask 261120
        %v648 = vsel %vm647, %v646, %v614
        %vm649 = vcmask 326656
        %v650 = vsel %vm649, %v648, %v618
        %vm651 = vcmask 392192
        %v652 = vsel %vm651, %v650, %v622
        %vm653 = vcmask 457728
        %v654 = vsel %vm653, %v652, %v626
        %vm655 = vcmask 523264
        %v656 = vsel %vm655, %v654, %v630
        %vm657 = vcmask 588800
        %v658 = vsel %vm657, %v656, %v634
        %vm659 = vcmask 654336
        %v660 = vsel %vm659, %v658, %v638
        %vm661 = vcmask 719872
        %v662 = vsel %vm661, %v660, %v642
        %v663 = vld [vmem:[%s7] sm:$0xff]
        %v664 = vld [vmem:[%s7 + $0x8] sm:$0xff]
        %v665 = vld [vmem:[%s7 + $0x10] sm:$0xff]
        %v666 = vld [vmem:[%s7 + $0x18] sm:$0xff]
        %v667 = vld [vmem:[%s7 + $0x20] sm:$0xff]
        %v668 = vld [vmem:[%s7 + $0x28] sm:$0xff]
        %v669 = vld [vmem:[%s7 + $0x30] sm:$0xff]
        %v670 = vld [vmem:[%s7 + $0x38] sm:$0xff]
        %v671 = vld [vmem:[%s7 + $0x40] sm:$0xff]
        %v672 = vld [vmem:[%s7 + $0x48] sm:$0xff]
        %v673 = vld [vmem:[%s7 + $0x50] sm:$0xff]
        %v674 = vld [vmem:[%s7 + $0x58] sm:$0xff]
        %vm675 = vcmask 785408
        %v677 = vsel %vm675, %v662, 0
        %679 = vmatprep.subr.mxu0 0.0
        %680 = vmatpush1.msra.mxu0 0.0
        %681 = vmatprep.subr.mxu0 0.0
        %682 = vmatpush1.msra.mxu0 0.0
        %683 = vmatprep.subr.mxu0 0.0
        %684 = vmatpush1.msra.mxu0 0.0
        %685 = vmatprep.subr.mxu0 0.0
        %686 = vmatpush1.msra.mxu0 0.0
        %687 = vmatprep.subr.mxu0 0.0
        %688 = vmatpush1.msra.mxu0 %v674
        %689 = vmatprep.subr.mxu0 0.0
        %690 = vmatpush1.msra.mxu0 %v673
        %691 = vmatprep.subr.mxu0 0.0
        %692 = vmatpush1.msra.mxu0 %v672
        %693 = vmatprep.subr.mxu0 0.0
        %694 = vmatpush1.msra.mxu0 %v671
        %695 = vmatprep.subr.mxu0 0.0
        %696 = vmatpush1.msra.mxu0 %v670
        %697 = vmatprep.subr.mxu0 0.0
        %698 = vmatpush1.msra.mxu0 %v669
        %699 = vmatprep.subr.mxu0 0.0
        %700 = vmatpush1.msra.mxu0 %v668
        %701 = vmatprep.subr.mxu0 0.0
        %702 = vmatpush1.msra.mxu0 %v667
        %703 = vmatprep.subr.mxu0 0.0
        %704 = vmatpush1.msra.mxu0 %v666
        %705 = vmatprep.subr.mxu0 0.0
        %706 = vmatpush1.msra.mxu0 %v665
        %707 = vmatprep.subr.mxu0 0.0
        %708 = vmatpush1.msra.mxu0 %v664
        %709 = vmatprep.subr.mxu0 0.0
        %710 = vmatpush1.msra.mxu0 %v663
        %711 = vmatprep.subr.mxu0 0.0
        %712 = vmatpush2.msra.mxu0 0.0
        %713 = vmatprep.subr.mxu0 0.0
        %714 = vmatpush2.msra.mxu0 0.0
        %715 = vmatprep.subr.mxu0 0.0
        %716 = vmatpush2.msra.mxu0 0.0
        %717 = vmatprep.subr.mxu0 0.0
        %718 = vmatpush2.msra.mxu0 0.0
        %719 = vmatprep.subr.mxu0 0.0
        %720 = vmatpush2.msra.mxu0 0.0
        %721 = vmatprep.subr.mxu0 0.0
        %722 = vmatpush2.msra.mxu0 0.0
        %723 = vmatprep.subr.mxu0 0.0
        %724 = vmatpush2.msra.mxu0 0.0
        %725 = vmatprep.subr.mxu0 0.0
        %726 = vmatpush2.msra.mxu0 0.0
        %727 = vmatprep.subr.mxu0 0.0
        %728 = vmatpush2.msra.mxu0 0.0
        %729 = vmatprep.subr.mxu0 0.0
        %730 = vmatpush2.msra.mxu0 0.0
        %731 = vmatprep.subr.mxu0 0.0
        %732 = vmatpush2.msra.mxu0 0.0
        %733 = vmatprep.subr.mxu0 0.0
        %734 = vmatpush2.msra.mxu0 0.0
        %735 = vmatprep.subr.mxu0 0.0
        %736 = vmatpush2.msra.mxu0 0.0
        %737 = vmatprep.subr.mxu0 0.0
        %738 = vmatpush2.msra.mxu0 0.0
        %739 = vmatprep.subr.mxu0 0.0
        %740 = vmatpush2.msra.mxu0 0.0
        %741 = vmatprep.subr.mxu0 0.0
        %742 = vmatpush2.msra.mxu0 0.0
        %743 = vmatprep.mubr.f32.mxu0 0.0
        %744 = vmatmul.mubr.f32.gmra.mxu0 %v677
        %v745 = vpop.f32.mrf.mxu0
        %v746 = vadd.f32 0.0, %v745
        %v747 = vpop.f32.mrf.mxu0
        %748 = vdwg.mxu0
        %v749 = vmul.f32 %v746, %v746
        %vm750 = vcmask 253952
        %v751 = vsel %vm750, %v749, 0.0
        %752 = vadd.xlane.f32.xlu0 %v751
        %v753 = vpop.xlane.xlu0 %752
        %v754 = vadd.f32 %v753, 1e-12
        %v755 = vrsqrt.pop %v754
        %v756 = vmul.f32 %v746, %v755
        %757 = vst.msk [vmem:[%s295] sm:$0x1] %vm750, %v756
        %s758 = sand.u32 %s203, 1
        %s759 = scalar_lea.sflag [#allocation3], %s758
        %s760 = sand.u32 %s203, 1
        %s761 = scalar_lea.vmem [#allocation2], %s760
        // Predicated region
        $region53: #{tpu_custom_call.1} parent=51 // pred_check
          %p762 = pneg %p213
        $region54: #{tpu_custom_call.1} parent=51 // pred_check_branch
          %764 = sbr.rel (%p762) target = $region56
        $region55: #{tpu_custom_call.1} parent=51 // pred_region
          %s766 = ssub.s32 16, 16
          %767 = vsyncadd %s759, %s766
          %s768 = smul.addr %s22, 16
          %s769 = scalar_lea.hbm %s8, %s768
          %s771 = sshll.u32 %s761, 4
          %s772 = int_to_ptr.vmem [resolvable:$true] %s771
          %774 = dma.vmem_to_hbm [thread:$0]  %s772, 16, %s769, %s759
        $region56: #{tpu_custom_call.1} parent=51 // pred_fallthru
          _
      $region52: #{tpu_custom_call.1} parent=5 // pred_fallthru
        _
      %p775 = scmp.le.s32.totalorder 2, %s17
      // Predicated region
      $region57: #{tpu_custom_call.1} parent=5 // pred_check
        %p776 = pneg %p775
      $region58: #{tpu_custom_call.1} parent=5 // pred_check_branch
        %778 = sbr.rel (%p776) target = $region60
      $region59: #{tpu_custom_call.1} parent=5 // pred_region
        %s779 = ssub.s32 %s17, 2
        // Predicated region
        $region61: #{tpu_custom_call.1} parent=59 // pred_check
          %p780 = pneg %p219
        $region62: #{tpu_custom_call.1} parent=59 // pred_check_branch
          %782 = sbr.rel (%p780) target = $region64
        $region63: #{tpu_custom_call.1} parent=59 // pred_region
          %s783 = sand.u32 %s204, 1
          %s784 = scalar_lea.sflag [#allocation3], %s783
          %s785 = sand.u32 %s204, 1
          %s786 = scalar_lea.vmem [#allocation2], %s785
          %787 = dma.done %s784, 16
        $region64: #{tpu_custom_call.1} parent=59 // pred_fallthru
          _
      $region60: #{tpu_custom_call.1} parent=5 // pred_fallthru
        _
    $region6: #{tpu_custom_call.1} parent=1 // loop_footer
      %s21 = sadd.s32 1, %s17
    $region7: #{tpu_custom_call.1} parent=1 // loop_footer_branch
      %16 = sbr.rel target = $region3
    $region8: #{tpu_custom_call.1} parent=1 // loop_exit
      _
    %788 = vsyncpa [#allocation3], 1
    %s789 = scalar_lea.sflag [#allocation3], 1
    %790 = vsyncpa %s789, 1

</llo_original>
